<compile_context>
chip_gen: v7x
topology: tpu7x:2x2x1
jax: 0.10.0
libtpu: 0.0.40
codegen_flags: <defaults>
</compile_context>

<pallas_src>
import functools
import math

import jax
import jax.numpy as jnp
from jax import lax
from jax.experimental import pallas as pl
from jax.experimental.pallas import tpu as pltpu


# ---------------------------------------------------------------------------
# Per-generation VMEM budgeting
# ---------------------------------------------------------------------------
def _vmem_budgets():
    """(block_budget_bytes, vmem_limit_bytes) sized from the actual chip."""
    cap = 64 * 1024 * 1024                     # conservative default (v7x per-TC VMEM)
    try:
        cap = int(pltpu.get_tpu_info().vmem_capacity_bytes)
    except Exception:
        pass
    vmem_limit = max(32 * 1024 * 1024, min(cap * 3 // 4, 112 * 1024 * 1024))
    block_budget = max(12 * 1024 * 1024, cap * 2 // 5)
    return block_budget, vmem_limit


def _choose_t_tile(B, C_in, C_out, T, N, in_isz, budget):
    """Largest t_tile (divisor of T) whose working set fits `budget`.

    The x block's last dim is t_tile*N, which must be a multiple of 128 or the
    full T*N extent (BlockSpec (8,128) rule).  If B == 1, prefer a split that
    leaves >= 2 grid steps so both v7x TensorCores get work."""
    def footprint(tt):
        st = tt * N
        return (2 * C_in * st * in_isz              # x block, double-buffered
                + 2 * tt * N * C_out * 4            # out block (f32), double-buffered
                + st * C_out * in_isz               # Z scratch
                + 2 * (N * N + C_in * C_out) * in_isz   # gso + W (double-buffered)
                + 2 * C_out * 4)                    # bias

    cands = [tt for tt in range(1, T + 1)
             if T % tt == 0 and (tt == T or (tt * N) % 128 == 0)]
    fitting = [tt for tt in cands if footprint(tt) <= budget]
    pool = fitting if fitting else [min(cands, key=footprint)]
    if B == 1:
        multi = [tt for tt in pool if T // tt >= 2]
        if multi:
            return max(multi)
    return max(pool)


# ---------------------------------------------------------------------------
# Fused kernel: channel mix (one big matmul) + per-t vertex mix (+ bias)
# ---------------------------------------------------------------------------
def _graph_conv_kernel(x_ref, g_ref, w_ref, b_ref, o_ref, z_ref, *,
                       t_tile, n_vertex):
    # x_ref: (1, C_in, t_tile*N)      g_ref: (N, N)        w_ref: (C_in, C_out)
    # b_ref: (1, C_out) f32           o_ref: (1, t_tile, N, C_out) f32
    # z_ref: (t_tile*N, C_out) VMEM scratch in the compute dtype.
    xb = x_ref[0, :, :]                                        # (C_in, S_t)

    # Channel mix: contract C_in (transposed-LHS matmul), f32 accumulation.
    z = lax.dot_general(xb, w_ref[...], (((0,), (0,)), ((), ())),
                        preferred_element_type=jnp.float32)    # (S_t, C_out)
    z_ref[...] = z.astype(z_ref.dtype)

    g = g_ref[...]
    bias_row = b_ref[...]                                      # (1, C_out)

    # Vertex mix per t (static unroll -- t_tile is small in STGCN), lane = C_out,
    # so the output is written directly in the module's (B, T, N, C_out) layout.
    for t in range(t_tile):
        z_t = z_ref[pl.ds(t * n_vertex, n_vertex), :]          # (N, C_out)
        y_t = jnp.dot(g, z_t, preferred_element_type=jnp.float32)
        o_ref[0, t, :, :] = (y_t + bias_row).astype(o_ref.dtype)


# ---------------------------------------------------------------------------
# GraphConv forward
# ---------------------------------------------------------------------------
def graph_conv(x_nchw, gso, weight, bias=None, *, compute_dtype=jnp.float32):
    """x_nchw: (B, C_in, T, N). Returns (B, T, N, C_out), matching the module."""
    B, C_in, T, N = x_nchw.shape
    C_out = weight.shape[1]
    cdt = jnp.dtype(compute_dtype)
    in_isz = cdt.itemsize

    block_budget, vmem_limit = _vmem_budgets()
    t_tile = _choose_t_tile(B, C_in, C_out, T, N, in_isz, block_budget)
    s_t = t_tile * N

    x2 = x_nchw.reshape(B, C_in, T * N).astype(cdt)   # metadata-only reshape
    g = jnp.asarray(gso).astype(cdt)                  # (N, N)
    w = jnp.asarray(weight).astype(cdt)               # (C_in, C_out)
    if bias is not None:
        b2 = jnp.asarray(bias).astype(jnp.float32).reshape(1, C_out)
    else:
        b2 = jnp.zeros((1, C_out), jnp.float32)       # exact no-op add

    flops = 2 * B * T * N * C_out * (N + C_in)
    bytes_accessed = (x2.size * in_isz + B * T * N * C_out * 4
                      + N * N * in_isz + C_in * C_out * in_isz + C_out * 4)

    kernel = functools.partial(_graph_conv_kernel, t_tile=t_tile, n_vertex=N)
    return pl.pallas_call(
        kernel,
        out_shape=jax.ShapeDtypeStruct((B, T, N, C_out), jnp.float32),
        grid_spec=pltpu.PrefetchScalarGridSpec(
            num_scalar_prefetch=0,
            grid=(B, T // t_tile),
            in_specs=[
                pl.BlockSpec((1, C_in, s_t), lambda b, tb: (b, 0, tb)),
                pl.BlockSpec((N, N), lambda b, tb: (0, 0)),
                pl.BlockSpec((C_in, C_out), lambda b, tb: (0, 0)),
                pl.BlockSpec((1, C_out), lambda b, tb: (0, 0)),
            ],
            out_specs=pl.BlockSpec((1, t_tile, N, C_out),
                                   lambda b, tb: (b, tb, 0, 0)),
            scratch_shapes=[pltpu.VMEM((s_t, C_out), cdt)],
        ),
        compiler_params=pltpu.CompilerParams(
            dimension_semantics=("parallel", "parallel"),
            vmem_limit_bytes=vmem_limit),
        cost_estimate=pl.CostEstimate(flops=flops, transcendentals=0,
                                      bytes_accessed=bytes_accessed),
    )(x2, g, w, b2)


# ---------------------------------------------------------------------------
# Parameter init mirroring the module's reset_parameters
# ---------------------------------------------------------------------------
def init_params(key, c_in, c_out, n_vertex):
    k_w, k_b, k_g = jax.random.split(key, 3)

    # kaiming_uniform_(weight, a=sqrt(5)); for a 2-D (c_in, c_out) tensor
    # PyTorch's fan_in = size(1) = c_out.
    a = math.sqrt(5)
    gain = math.sqrt(2.0 / (1.0 + a * a))
    fan_in = c_out
    bound_w = math.sqrt(3.0) * gain / math.sqrt(fan_in)
    weight = jax.random.uniform(k_w, (c_in, c_out), jnp.float32,
                                minval=-bound_w, maxval=bound_w)

    bound_b = 1.0 / math.sqrt(fan_in)
    bias = jax.random.uniform(k_b, (c_out,), jnp.float32,
                              minval=-bound_b, maxval=bound_b)

    # Synthetic graph shift operator: symmetric, row-normalized.
    g = jax.random.uniform(k_g, (n_vertex, n_vertex), jnp.float32)
    g = 0.5 * (g + g.T)
    gso = g / jnp.sum(g, axis=1, keepdims=True)
    return weight, bias, gso


if __name__ == "__main__":
    key = jax.random.PRNGKey(0)
    k_x, k_p, k_x2, k_p2 = jax.random.split(key, 4)

    gc_f32 = jax.jit(graph_conv)
    gc_bf16 = jax.jit(lambda x, g, w, b: graph_conv(x, g, w, b,
                                                    compute_dtype=jnp.bfloat16))

    def ref_fn(x, gso, w, b):
        xp = jnp.transpose(x, (0, 2, 3, 1))
        first = jnp.einsum('hi,btij->bthj', gso, xp)
        out = jnp.einsum('bthi,ij->bthj', first, w)
        return out + b if b is not None else out

    # --- Case 1: channel-expanding layer, with bias -------------------------
    B, C_in, T, N = 2, 4, 8, 16
    C_out = 6
    x = jax.random.normal(k_x, (B, C_in, T, N), jnp.float32)   # NCHW
    weight, bias, gso = init_params(k_p, C_in, C_out, N)

    out = jax.block_until_ready(gc_f32(x, gso, weight, bias))
    ref = ref_fn(x, gso, weight, bias)
    assert out.shape == (B, T, N, C_out)
    assert jnp.allclose(out, ref, atol=1e-4, rtol=1e-4)

    # --- Case 2: channel-reducing layer, with bias --------------------------
    C_in2, C_out2 = 8, 4
    x2 = jax.random.normal(k_x2, (B, C_in2, T, N), jnp.float32)
    w2, b2, gso2 = init_params(k_p2, C_in2, C_out2, N)

    out2 = jax.block_until_ready(gc_f32(x2, gso2, w2, b2))
    ref2 = ref_fn(x2, gso2, w2, b2)
    assert out2.shape == (B, T, N, C_out2)
    assert jnp.allclose(out2, ref2, atol=1e-4, rtol=1e-4)

    # --- Case 3: no-bias path ------------------------------------------------
    out3 = jax.block_until_ready(gc_f32(x, gso, weight, None))
    ref3 = ref_fn(x, gso, weight, None)
    assert jnp.allclose(out3, ref3, atol=1e-4, rtol=1e-4)

    # --- Case 4: bf16 inputs, f32 accumulation (halves HBM read traffic) ----
    out4 = jax.block_until_ready(gc_bf16(x, gso, weight, bias))
    assert out4.shape == (B, T, N, C_out)
    assert jnp.allclose(out4, ref, atol=5e-2, rtol=5e-2)

    print("KERNEL_OK")
</pallas_src>

<mosaic_0001>
module attributes {stable_mosaic.version = 11 : i64} {
  func.func @_graph_conv_kernel(%arg0: i32, %arg1: i32, %arg2: memref<1x4x128xf32, #tpu.memory_space<vmem>>, %arg3: memref<16x16xf32, #tpu.memory_space<vmem>>, %arg4: memref<4x6xf32, #tpu.memory_space<vmem>>, %arg5: memref<1x6xf32, #tpu.memory_space<vmem>>, %arg6: memref<1x8x16x6xf32, #tpu.memory_space<vmem>>, %arg7: memref<128x6xf32, #tpu.memory_space<vmem>>) attributes {dimension_semantics = [#tpu.dimension_semantics<parallel>, #tpu.dimension_semantics<parallel>], iteration_bounds = array<i64: 2, 1>, scalar_prefetch = 0 : i64, scratch_operands = 1 : i64, tpu.core_type = #tpu.core_type<tc>, window_params = [{transform_indices = @transform_0, window_bounds = array<i64: 1, 4, 128>}, {pipeline_mode = #tpu.pipeline_mode<synchronous>, transform_indices = @transform_1, window_bounds = array<i64: 16, 16>}, {pipeline_mode = #tpu.pipeline_mode<synchronous>, transform_indices = @transform_2, window_bounds = array<i64: 4, 6>}, {pipeline_mode = #tpu.pipeline_mode<synchronous>, transform_indices = @transform_3, window_bounds = array<i64: 1, 6>}, {transform_indices = @transform_4, window_bounds = array<i64: 1, 8, 16, 6>}]} {
    %c0 = arith.constant 0 : index
    %c0_0 = arith.constant 0 : index
    %c0_1 = arith.constant 0 : index
    %0 = vector.load %arg2[%c0, %c0_0, %c0_1] : memref<1x4x128xf32, #tpu.memory_space<vmem>>, vector<1x4x128xf32>
    %1 = vector.shape_cast %0 : vector<1x4x128xf32> to vector<4x128xf32>
    %c0_2 = arith.constant 0 : index
    %c0_3 = arith.constant 0 : index
    %2 = vector.load %arg4[%c0_2, %c0_3] : memref<4x6xf32, #tpu.memory_space<vmem>>, vector<4x6xf32>
    %cst = arith.constant dense<0.000000e+00> : vector<128x6xf32>
    %3 = tpu.matmul %1, %2, %cst {dimension_numbers = #tpu.dot_dimension_numbers<[0], [0], [1], [1], [0, 1, 1, 1], [], []>} : vector<4x128xf32>, vector<4x6xf32>, vector<128x6xf32> -> vector<128x6xf32>
    %c0_4 = arith.constant 0 : index
    %c0_5 = arith.constant 0 : index
    %4 = vector.load %arg7[%c0_4, %c0_5] : memref<128x6xf32, #tpu.memory_space<vmem>>, vector<128x6xf32>
    tpu.vector_store %arg7[%c0_4, %c0_5], %3 {strides = array<i32>} : memref<128x6xf32, #tpu.memory_space<vmem>>, vector<128x6xf32>,
    %c0_6 = arith.constant 0 : index
    %c0_7 = arith.constant 0 : index
    %5 = vector.load %arg3[%c0_6, %c0_7] : memref<16x16xf32, #tpu.memory_space<vmem>>, vector<16x16xf32>
    %c0_8 = arith.constant 0 : index
    %c0_9 = arith.constant 0 : index
    %6 = vector.load %arg5[%c0_8, %c0_9] : memref<1x6xf32, #tpu.memory_space<vmem>>, vector<1x6xf32>
    %c0_10 = arith.constant 0 : index
    %c0_11 = arith.constant 0 : index
    %7 = vector.load %arg7[%c0_10, %c0_11] : memref<128x6xf32, #tpu.memory_space<vmem>>, vector<16x6xf32>
    %cst_12 = arith.constant dense<0.000000e+00> : vector<16x6xf32>
    %8 = tpu.matmul %5, %7, %cst_12 {dimension_numbers = #tpu.dot_dimension_numbers<[1], [0], [0], [1], [0, 0, 1, 1], [], []>} : vector<16x16xf32>, vector<16x6xf32>, vector<16x6xf32> -> vector<16x6xf32>
    %9 = vector.broadcast %6 : vector<1x6xf32> to vector<16x6xf32>
    %10 = arith.addf %8, %9 : vector<16x6xf32>
    %c0_13 = arith.constant 0 : index
    %c0_14 = arith.constant 0 : index
    %c0_15 = arith.constant 0 : index
    %c0_16 = arith.constant 0 : index
    %11 = vector.load %arg6[%c0_13, %c0_14, %c0_15, %c0_16] : memref<1x8x16x6xf32, #tpu.memory_space<vmem>>, vector<1x1x16x6xf32>
    %12 = vector.shape_cast %11 : vector<1x1x16x6xf32> to vector<16x6xf32>
    %13 = vector.shape_cast %10 : vector<16x6xf32> to vector<1x1x16x6xf32>
    tpu.vector_store %arg6[%c0_13, %c0_14, %c0_15, %c0_16], %13 {strides = array<i32>} : memref<1x8x16x6xf32, #tpu.memory_space<vmem>>, vector<1x1x16x6xf32>,
    %c16 = arith.constant 16 : index
    %c0_17 = arith.constant 0 : index
    %14 = vector.load %arg7[%c16, %c0_17] : memref<128x6xf32, #tpu.memory_space<vmem>>, vector<16x6xf32>
    %cst_18 = arith.constant dense<0.000000e+00> : vector<16x6xf32>
    %15 = tpu.matmul %5, %14, %cst_18 {dimension_numbers = #tpu.dot_dimension_numbers<[1], [0], [0], [1], [0, 0, 1, 1], [], []>} : vector<16x16xf32>, vector<16x6xf32>, vector<16x6xf32> -> vector<16x6xf32>
    %16 = vector.broadcast %6 : vector<1x6xf32> to vector<16x6xf32>
    %17 = arith.addf %15, %16 : vector<16x6xf32>
    %c0_19 = arith.constant 0 : index
    %c1 = arith.constant 1 : index
    %c0_20 = arith.constant 0 : index
    %c0_21 = arith.constant 0 : index
    %18 = vector.load %arg6[%c0_19, %c1, %c0_20, %c0_21] : memref<1x8x16x6xf32, #tpu.memory_space<vmem>>, vector<1x1x16x6xf32>
    %19 = vector.shape_cast %18 : vector<1x1x16x6xf32> to vector<16x6xf32>
    %20 = vector.shape_cast %17 : vector<16x6xf32> to vector<1x1x16x6xf32>
    tpu.vector_store %arg6[%c0_19, %c1, %c0_20, %c0_21], %20 {strides = array<i32>} : memref<1x8x16x6xf32, #tpu.memory_space<vmem>>, vector<1x1x16x6xf32>,
    %c32 = arith.constant 32 : index
    %c0_22 = arith.constant 0 : index
    %21 = vector.load %arg7[%c32, %c0_22] : memref<128x6xf32, #tpu.memory_space<vmem>>, vector<16x6xf32>
    %cst_23 = arith.constant dense<0.000000e+00> : vector<16x6xf32>
    %22 = tpu.matmul %5, %21, %cst_23 {dimension_numbers = #tpu.dot_dimension_numbers<[1], [0], [0], [1], [0, 0, 1, 1], [], []>} : vector<16x16xf32>, vector<16x6xf32>, vector<16x6xf32> -> vector<16x6xf32>
    %23 = vector.broadcast %6 : vector<1x6xf32> to vector<16x6xf32>
    %24 = arith.addf %22, %23 : vector<16x6xf32>
    %c0_24 = arith.constant 0 : index
    %c2 = arith.constant 2 : index
    %c0_25 = arith.constant 0 : index
    %c0_26 = arith.constant 0 : index
    %25 = vector.load %arg6[%c0_24, %c2, %c0_25, %c0_26] : memref<1x8x16x6xf32, #tpu.memory_space<vmem>>, vector<1x1x16x6xf32>
    %26 = vector.shape_cast %25 : vector<1x1x16x6xf32> to vector<16x6xf32>
    %27 = vector.shape_cast %24 : vector<16x6xf32> to vector<1x1x16x6xf32>
    tpu.vector_store %arg6[%c0_24, %c2, %c0_25, %c0_26], %27 {strides = array<i32>} : memref<1x8x16x6xf32, #tpu.memory_space<vmem>>, vector<1x1x16x6xf32>,
    %c48 = arith.constant 48 : index
    %c0_27 = arith.constant 0 : index
    %28 = vector.load %arg7[%c48, %c0_27] : memref<128x6xf32, #tpu.memory_space<vmem>>, vector<16x6xf32>
    %cst_28 = arith.constant dense<0.000000e+00> : vector<16x6xf32>
    %29 = tpu.matmul %5, %28, %cst_28 {dimension_numbers = #tpu.dot_dimension_numbers<[1], [0], [0], [1], [0, 0, 1, 1], [], []>} : vector<16x16xf32>, vector<16x6xf32>, vector<16x6xf32> -> vector<16x6xf32>
    %30 = vector.broadcast %6 : vector<1x6xf32> to vector<16x6xf32>
    %31 = arith.addf %29, %30 : vector<16x6xf32>
    %c0_29 = arith.constant 0 : index
    %c3 = arith.constant 3 : index
    %c0_30 = arith.constant 0 : index
    %c0_31 = arith.constant 0 : index
    %32 = vector.load %arg6[%c0_29, %c3, %c0_30, %c0_31] : memref<1x8x16x6xf32, #tpu.memory_space<vmem>>, vector<1x1x16x6xf32>
    %33 = vector.shape_cast %32 : vector<1x1x16x6xf32> to vector<16x6xf32>
    %34 = vector.shape_cast %31 : vector<16x6xf32> to vector<1x1x16x6xf32>
    tpu.vector_store %arg6[%c0_29, %c3, %c0_30, %c0_31], %34 {strides = array<i32>} : memref<1x8x16x6xf32, #tpu.memory_space<vmem>>, vector<1x1x16x6xf32>,
    %c64 = arith.constant 64 : index
    %c0_32 = arith.constant 0 : index
    %35 = vector.load %arg7[%c64, %c0_32] : memref<128x6xf32, #tpu.memory_space<vmem>>, vector<16x6xf32>
    %cst_33 = arith.constant dense<0.000000e+00> : vector<16x6xf32>
    %36 = tpu.matmul %5, %35, %cst_33 {dimension_numbers = #tpu.dot_dimension_numbers<[1], [0], [0], [1], [0, 0, 1, 1], [], []>} : vector<16x16xf32>, vector<16x6xf32>, vector<16x6xf32> -> vector<16x6xf32>
    %37 = vector.broadcast %6 : vector<1x6xf32> to vector<16x6xf32>
    %38 = arith.addf %36, %37 : vector<16x6xf32>
    %c0_34 = arith.constant 0 : index
    %c4 = arith.constant 4 : index
    %c0_35 = arith.constant 0 : index
    %c0_36 = arith.constant 0 : index
    %39 = vector.load %arg6[%c0_34, %c4, %c0_35, %c0_36] : memref<1x8x16x6xf32, #tpu.memory_space<vmem>>, vector<1x1x16x6xf32>
    %40 = vector.shape_cast %39 : vector<1x1x16x6xf32> to vector<16x6xf32>
    %41 = vector.shape_cast %38 : vector<16x6xf32> to vector<1x1x16x6xf32>
    tpu.vector_store %arg6[%c0_34, %c4, %c0_35, %c0_36], %41 {strides = array<i32>} : memref<1x8x16x6xf32, #tpu.memory_space<vmem>>, vector<1x1x16x6xf32>,
    %c80 = arith.constant 80 : index
    %c0_37 = arith.constant 0 : index
    %42 = vector.load %arg7[%c80, %c0_37] : memref<128x6xf32, #tpu.memory_space<vmem>>, vector<16x6xf32>
    %cst_38 = arith.constant dense<0.000000e+00> : vector<16x6xf32>
    %43 = tpu.matmul %5, %42, %cst_38 {dimension_numbers = #tpu.dot_dimension_numbers<[1], [0], [0], [1], [0, 0, 1, 1], [], []>} : vector<16x16xf32>, vector<16x6xf32>, vector<16x6xf32> -> vector<16x6xf32>
    %44 = vector.broadcast %6 : vector<1x6xf32> to vector<16x6xf32>
    %45 = arith.addf %43, %44 : vector<16x6xf32>
    %c0_39 = arith.constant 0 : index
    %c5 = arith.constant 5 : index
    %c0_40 = arith.constant 0 : index
    %c0_41 = arith.constant 0 : index
    %46 = vector.load %arg6[%c0_39, %c5, %c0_40, %c0_41] : memref<1x8x16x6xf32, #tpu.memory_space<vmem>>, vector<1x1x16x6xf32>
    %47 = vector.shape_cast %46 : vector<1x1x16x6xf32> to vector<16x6xf32>
    %48 = vector.shape_cast %45 : vector<16x6xf32> to vector<1x1x16x6xf32>
    tpu.vector_store %arg6[%c0_39, %c5, %c0_40, %c0_41], %48 {strides = array<i32>} : memref<1x8x16x6xf32, #tpu.memory_space<vmem>>, vector<1x1x16x6xf32>,
    %c96 = arith.constant 96 : index
    %c0_42 = arith.constant 0 : index
    %49 = vector.load %arg7[%c96, %c0_42] : memref<128x6xf32, #tpu.memory_space<vmem>>, vector<16x6xf32>
    %cst_43 = arith.constant dense<0.000000e+00> : vector<16x6xf32>
    %50 = tpu.matmul %5, %49, %cst_43 {dimension_numbers = #tpu.dot_dimension_numbers<[1], [0], [0], [1], [0, 0, 1, 1], [], []>} : vector<16x16xf32>, vector<16x6xf32>, vector<16x6xf32> -> vector<16x6xf32>
    %51 = vector.broadcast %6 : vector<1x6xf32> to vector<16x6xf32>
    %52 = arith.addf %50, %51 : vector<16x6xf32>
    %c0_44 = arith.constant 0 : index
    %c6 = arith.constant 6 : index
    %c0_45 = arith.constant 0 : index
    %c0_46 = arith.constant 0 : index
    %53 = vector.load %arg6[%c0_44, %c6, %c0_45, %c0_46] : memref<1x8x16x6xf32, #tpu.memory_space<vmem>>, vector<1x1x16x6xf32>
    %54 = vector.shape_cast %53 : vector<1x1x16x6xf32> to vector<16x6xf32>
    %55 = vector.shape_cast %52 : vector<16x6xf32> to vector<1x1x16x6xf32>
    tpu.vector_store %arg6[%c0_44, %c6, %c0_45, %c0_46], %55 {strides = array<i32>} : memref<1x8x16x6xf32, #tpu.memory_space<vmem>>, vector<1x1x16x6xf32>,
    %c112 = arith.constant 112 : index
    %c0_47 = arith.constant 0 : index
    %56 = vector.load %arg7[%c112, %c0_47] : memref<128x6xf32, #tpu.memory_space<vmem>>, vector<16x6xf32>
    %cst_48 = arith.constant dense<0.000000e+00> : vector<16x6xf32>
    %57 = tpu.matmul %5, %56, %cst_48 {dimension_numbers = #tpu.dot_dimension_numbers<[1], [0], [0], [1], [0, 0, 1, 1], [], []>} : vector<16x16xf32>, vector<16x6xf32>, vector<16x6xf32> -> vector<16x6xf32>
    %58 = vector.broadcast %6 : vector<1x6xf32> to vector<16x6xf32>
    %59 = arith.addf %57, %58 : vector<16x6xf32>
    %c0_49 = arith.constant 0 : index
    %c7 = arith.constant 7 : index
    %c0_50 = arith.constant 0 : index
    %c0_51 = arith.constant 0 : index
    %60 = vector.load %arg6[%c0_49, %c7, %c0_50, %c0_51] : memref<1x8x16x6xf32, #tpu.memory_space<vmem>>, vector<1x1x16x6xf32>
    %61 = vector.shape_cast %60 : vector<1x1x16x6xf32> to vector<16x6xf32>
    %62 = vector.shape_cast %59 : vector<16x6xf32> to vector<1x1x16x6xf32>
    tpu.vector_store %arg6[%c0_49, %c7, %c0_50, %c0_51], %62 {strides = array<i32>} : memref<1x8x16x6xf32, #tpu.memory_space<vmem>>, vector<1x1x16x6xf32>,
    return
  }
  func.func @transform_0(%arg0: i32, %arg1: i32) -> (i32, i32, i32) {
    %c0_i32 = arith.constant 0 : i32
    %c0_i32_0 = arith.constant 0 : i32
    return %arg0, %c0_i32, %arg1 : i32, i32, i32
  }
  func.func @transform_1(%arg0: i32, %arg1: i32) -> (i32, i32) {
    %c0_i32 = arith.constant 0 : i32
    %c0_i32_0 = arith.constant 0 : i32
    %c0_i32_1 = arith.constant 0 : i32
    return %c0_i32, %c0_i32_0 : i32, i32
  }
  func.func @transform_2(%arg0: i32, %arg1: i32) -> (i32, i32) {
    %c0_i32 = arith.constant 0 : i32
    %c0_i32_0 = arith.constant 0 : i32
    %c0_i32_1 = arith.constant 0 : i32
    return %c0_i32, %c0_i32_0 : i32, i32
  }
  func.func @transform_3(%arg0: i32, %arg1: i32) -> (i32, i32) {
    %c0_i32 = arith.constant 0 : i32
    %c0_i32_0 = arith.constant 0 : i32
    %c0_i32_1 = arith.constant 0 : i32
    return %c0_i32, %c0_i32_0 : i32, i32
  }
  func.func @transform_4(%arg0: i32, %arg1: i32) -> (i32, i32, i32, i32) {
    %c0_i32 = arith.constant 0 : i32
    %c0_i32_0 = arith.constant 0 : i32
    %c0_i32_1 = arith.constant 0 : i32
    return %arg0, %arg1, %c0_i32, %c0_i32_0 : i32, i32, i32, i32
  }
}

</mosaic_0001>

<llo_original>
// kernel: graph_conv.1
$region0: #{graph_conv.1}
  #allocation0 [shape = 'u32[]', space=smem, size = 0x4, offset = 0x4, fixed_abs, tag = 'smem constant byte address 0x4 - core index']
  #allocation1 [shape = 'u32[144,128]{1,0:T(1,128)}', space=vmem, size = 0x12000, scoped, tag = 'internal scratch']
  #allocation2 [shape = 'f32[128,6]{1,0:T(8,128)}', space=vmem, size = 0x10000, scoped, tag = 'scratch operand']
  %s0 = inlined_call_operand.vmem [shape: f32[2,4,128], index: 0, kind: input, shape index: {}]
  %s1 = inlined_call_operand.vmem [shape: f32[16,16], index: 1, kind: input, shape index: {}]
  %s2 = inlined_call_operand.vmem [shape: f32[4,6], index: 2, kind: input, shape index: {}]
  %s3 = inlined_call_operand.vmem [shape: f32[1,6], index: 3, kind: input, shape index: {}]
  %s4 = inlined_call_operand.vmem [shape: f32[2,8,16,6], index: 4, kind: output, shape index: {}]
  %s5 = sld [smem:[#allocation0]]
  $region49: #{graph_conv.1} parent=0
    _
  %s7 = ssub.s32 1, %s5
  %s8 = scalar_select 0, %s7, %s5
  loop: start=0, step=1, limit=4
  $region2: #{graph_conv.1} parent=0 // loop_pre_header
    _
  $region3: #{graph_conv.1} parent=0 // loop_header
    %s10 = sphi 0, %s14
    %p11 = scmp.ge.s32.totalorder %s10, 4
    %s17 = sphi 0, %s29
    %s18 = sphi 0, %s25
    %s19 = sphi 0, %s17
    %s20 = sphi 0, %s18
    %s21 = sphi 0, %s19
    %s22 = sphi 0, %s20
    %s34 = sphi 0, %s36
    %s37 = sphi 0, %s34
    %s38 = sphi 0, %s37
    %s54 = sphi 0, %s38
    %s58 = sphi 0, %s58
    %s60 = sphi 0, %s58
    %s61 = sphi 0, %s60
    %s75 = sphi 0, %s61
    %s79 = sphi 0, %s79
    %s81 = sphi 0, %s79
    %s82 = sphi 0, %s81
    %s96 = sphi 0, %s82
    %s100 = sphi 0, %s100
    %s102 = sphi 0, %s100
    %s103 = sphi 0, %s102
    %s117 = sphi 0, %s103
    %s125 = sphi 0, %s127
    %s128 = sphi 0, %s125
    %s129 = sphi 0, %s128
    %s145 = sphi 0, %s129
  $region4: #{graph_conv.1} parent=0 // loop_header_branch
    %13 = sbr.rel (%p11) target = $region8
  $region5: #{graph_conv.1} parent=0 // loop_body
    %s15 = ssub.s32 %s10, 1
    %s16 = ssub.s32 %s10, 2
    %s23 = sadd.s32 1, %s18
    %p24 = scmp.ge.s32.totalorder %s23, 1
    %s25 = scalar_select %p24, 0, %s23
    %s26 = sadd.s32 1, %s17
    %s27 = scalar_select %p24, %s26, %s17
    %p28 = scmp.ge.s32.totalorder %s27, 2
    %s29 = scalar_select %p28, 0, %s27
    %s30 = ssub.s32 %s17, %s29
    %s31 = ssub.s32 %s18, %s25
    %s32 = sor.u32 %s30, %s31
    %p33 = scmp.eq.s32.totalorder %s32, 0
    %s35 = sadd.s32 %s34, 1
    %s36 = scalar_select %p33, %s34, %s35
    %p39 = pneg %p33
    %p40 = scmp.eq.s32.totalorder %s10, 1
    %p41 = por %p39, %p40
    %p42 = scmp.ne.s32.totalorder %s34, %s37
    %p43 = scmp.eq.s32.totalorder %s10, 0
    %p44 = por %p42, %p43
    %p45 = scmp.ne.s32.totalorder %s34, %s37
    %p46 = scmp.eq.s32.totalorder %s15, 1
    %p47 = por %p45, %p46
    %p48 = scmp.ne.s32.totalorder %s37, %s38
    %p49 = scmp.eq.s32.totalorder %s15, 0
    %p50 = por %p48, %p49
    %p51 = scmp.ne.s32.totalorder %s37, %s38
    %p52 = scmp.eq.s32.totalorder %s16, 1
    %p53 = por %p51, %p52
    %p55 = scmp.ne.s32.totalorder %s38, %s54
    %p56 = scmp.eq.s32.totalorder %s16, 0
    %p57 = por %p55, %p56
    %s59 = sadd.s32 %s58, 1
    %p62 = scmp.eq.s32.totalorder %s10, 1
    %p63 = scmp.ne.s32.totalorder %s58, %s60
    %p64 = scmp.eq.s32.totalorder %s10, 0
    %p65 = por %p63, %p64
    %p66 = scmp.ne.s32.totalorder %s58, %s60
    %p67 = scmp.eq.s32.totalorder %s15, 1
    %p68 = por %p66, %p67
    %p69 = scmp.ne.s32.totalorder %s60, %s61
    %p70 = scmp.eq.s32.totalorder %s15, 0
    %p71 = por %p69, %p70
    %p72 = scmp.ne.s32.totalorder %s60, %s61
    %p73 = scmp.eq.s32.totalorder %s16, 1
    %p74 = por %p72, %p73
    %p76 = scmp.ne.s32.totalorder %s61, %s75
    %p77 = scmp.eq.s32.totalorder %s16, 0
    %p78 = por %p76, %p77
    %s80 = sadd.s32 %s79, 1
    %p83 = scmp.eq.s32.totalorder %s10, 1
    %p84 = scmp.ne.s32.totalorder %s79, %s81
    %p85 = scmp.eq.s32.totalorder %s10, 0
    %p86 = por %p84, %p85
    %p87 = scmp.ne.s32.totalorder %s79, %s81
    %p88 = scmp.eq.s32.totalorder %s15, 1
    %p89 = por %p87, %p88
    %p90 = scmp.ne.s32.totalorder %s81, %s82
    %p91 = scmp.eq.s32.totalorder %s15, 0
    %p92 = por %p90, %p91
    %p93 = scmp.ne.s32.totalorder %s81, %s82
    %p94 = scmp.eq.s32.totalorder %s16, 1
    %p95 = por %p93, %p94
    %p97 = scmp.ne.s32.totalorder %s82, %s96
    %p98 = scmp.eq.s32.totalorder %s16, 0
    %p99 = por %p97, %p98
    %s101 = sadd.s32 %s100, 1
    %p104 = scmp.eq.s32.totalorder %s10, 1
    %p105 = scmp.ne.s32.totalorder %s100, %s102
    %p106 = scmp.eq.s32.totalorder %s10, 0
    %p107 = por %p105, %p106
    %p108 = scmp.ne.s32.totalorder %s100, %s102
    %p109 = scmp.eq.s32.totalorder %s15, 1
    %p110 = por %p108, %p109
    %p111 = scmp.ne.s32.totalorder %s102, %s103
    %p112 = scmp.eq.s32.totalorder %s15, 0
    %p113 = por %p111, %p112
    %p114 = scmp.ne.s32.totalorder %s102, %s103
    %p115 = scmp.eq.s32.totalorder %s16, 1
    %p116 = por %p114, %p115
    %p118 = scmp.ne.s32.totalorder %s103, %s117
    %p119 = scmp.eq.s32.totalorder %s16, 0
    %p120 = por %p118, %p119
    %s121 = ssub.s32 %s17, %s29
    %s122 = ssub.s32 %s18, %s25
    %s123 = sor.u32 %s121, %s122
    %p124 = scmp.eq.s32.totalorder %s123, 0
    %s126 = sadd.s32 %s125, 1
    %s127 = scalar_select %p124, %s125, %s126
    %p130 = pneg %p124
    %p131 = scmp.eq.s32.totalorder %s10, 1
    %p132 = por %p130, %p131
    %p133 = scmp.ne.s32.totalorder %s125, %s128
    %p134 = scmp.eq.s32.totalorder %s10, 0
    %p135 = por %p133, %p134
    %p136 = scmp.ne.s32.totalorder %s125, %s128
    %p137 = scmp.eq.s32.totalorder %s15, 1
    %p138 = por %p136, %p137
    %p139 = scmp.ne.s32.totalorder %s128, %s129
    %p140 = scmp.eq.s32.totalorder %s15, 0
    %p141 = por %p139, %p140
    %p142 = scmp.ne.s32.totalorder %s128, %s129
    %p143 = scmp.eq.s32.totalorder %s16, 1
    %p144 = por %p142, %p143
    %p146 = scmp.ne.s32.totalorder %s129, %s145
    %p147 = scmp.eq.s32.totalorder %s16, 0
    %p148 = por %p146, %p147
    %p149 = scmp.le.s32.totalorder 1, %s10
    %p150 = scmp.lt.s32.totalorder %s10, 3
    %p151 = pnand %p149, %p150
    %p152 = pneg %p151
    // Predicated region
    $region9: #{graph_conv.1} parent=5 // pred_check
      _
    $region10: #{graph_conv.1} parent=5 // pred_check_branch
      %154 = sbr.rel (%p151) target = $region12
    $region11: #{graph_conv.1} parent=5 // pred_region
      %s155 = ssub.s32 %s10, 1
      // Predicated region
      $region13: #{graph_conv.1} parent=11 // pred_check
        %p156 = pneg %p71
      $region14: #{graph_conv.1} parent=11 // pred_check_branch
        %158 = sbr.rel (%p156) target = $region16
      $region15: #{graph_conv.1} parent=11 // pred_region
        _
      $region16: #{graph_conv.1} parent=11 // pred_fallthru
        _
      // Predicated region
      $region17: #{graph_conv.1} parent=11 // pred_check
        %p159 = pneg %p92
      $region18: #{graph_conv.1} parent=11 // pred_check_branch
        %161 = sbr.rel (%p159) target = $region20
      $region19: #{graph_conv.1} parent=11 // pred_region
        _
      $region20: #{graph_conv.1} parent=11 // pred_fallthru
        _
      // Predicated region
      $region21: #{graph_conv.1} parent=11 // pred_check
        %p162 = pneg %p113
      $region22: #{graph_conv.1} parent=11 // pred_check_branch
        %164 = sbr.rel (%p162) target = $region24
      $region23: #{graph_conv.1} parent=11 // pred_region
        _
      $region24: #{graph_conv.1} parent=11 // pred_fallthru
        _
    $region12: #{graph_conv.1} parent=5 // pred_fallthru
      _
    %p165 = scmp.lt.s32.totalorder %s10, 2
    // Predicated region
    $region25: #{graph_conv.1} parent=5 // pred_check
      %p166 = pneg %p165
    $region26: #{graph_conv.1} parent=5 // pred_check_branch
      %168 = sbr.rel (%p166) target = $region28
    $region27: #{graph_conv.1} parent=5 // pred_region
      // Predicated region
      $region29: #{graph_conv.1} parent=27 // pred_check
        %p169 = pneg %p44
      $region30: #{graph_conv.1} parent=27 // pred_check_branch
        %171 = sbr.rel (%p169) target = $region32
      $region31: #{graph_conv.1} parent=27 // pred_region
        %p172 = scmp.lt.s32.totalorder %s17, 1
        %s173 = scalar_select %p172, %s17, 1
        %p174 = scmp.lt.s32.totalorder %s18, 0
        %s175 = scalar_select %p174, %s18, 0
        %s176 = sadd.s32 %s175, %s173
        %s177 = smul.addr %s176, 4
        %s178 = scalar_lea.vmem %s0, %s177
      $region32: #{graph_conv.1} parent=27 // pred_fallthru
        _
    $region28: #{graph_conv.1} parent=5 // pred_fallthru
      _
    %p179 = scmp.le.s32.totalorder 1, %s10
    %p180 = scmp.lt.s32.totalorder %s10, 3
    %p181 = pnand %p179, %p180
    %p182 = pneg %p181
    // Predicated region
    $region33: #{graph_conv.1} parent=5 // pred_check
      _
    $region34: #{graph_conv.1} parent=5 // pred_check_branch
      %184 = sbr.rel (%p181) target = $region36
    $region35: #{graph_conv.1} parent=5 // pred_region
      %s185 = ssub.s32 %s10, 1
      %p186 = scmp.lt.s32.totalorder %s19, 1
      %s187 = scalar_select %p186, %s19, 1
      %p188 = scmp.lt.s32.totalorder %s20, 0
      %s189 = scalar_select %p188, %s20, 0
      %s190 = sadd.s32 %s189, %s187
      %s191 = smul.addr %s190, 4
      %s192 = scalar_lea.vmem %s0, %s191
      %p193 = pneg %p50
      %p194 = pneg %p47
      %p195 = pneg %p71
      %p196 = pneg %p68
      %p197 = pneg %p92
      %p198 = pneg %p89
      %p199 = pneg %p113
      %p200 = pneg %p110
      %p201 = pneg %p141
      %p202 = pneg %p138
      %s203 = smul.u32 8, %s20
      %p204 = scmp.lt.s32.totalorder %s19, 1
      %s205 = scalar_select %p204, %s19, 1
      %p206 = scmp.lt.s32.totalorder %s203, 7
      %s207 = scalar_select %p206, %s203, 7
      %s208 = smul.addr %s207, 2
      %s209 = smul.addr %s205, 16
      %s210 = sadd.s32 %s208, %s209
      %s211 = smul.addr %s210, 8
      %s212 = scalar_lea.vmem %s4, %s211
      %p213 = scmp.lt.s32.totalorder %s19, 1
      %s214 = scalar_select %p213, %s19, 1
      %p215 = scmp.lt.s32.totalorder %s20, 0
      %s216 = scalar_select %p215, %s20, 0
      %s217 = sadd.s32 %s216, %s214
      %s218 = smul.addr %s217, 4
      %s219 = scalar_lea.vmem %s0, %s218
      %s220 = smul.u32 8, %s20
      %p221 = scmp.lt.s32.totalorder %s19, 1
      %s222 = scalar_select %p221, %s19, 1
      %p223 = scmp.lt.s32.totalorder %s220, 7
      %s224 = scalar_select %p223, %s220, 7
      %s225 = smul.addr %s224, 2
      %s226 = smul.addr %s222, 16
      %s227 = sadd.s32 %s225, %s226
      %s228 = smul.addr %s227, 8
      %s229 = scalar_lea.vmem %s4, %s228
      %s230 = smul.u32 8, %s20
      %v231 = vld [vmem:[%s219] sm:$0xf]
      %v232 = vld [vmem:[%s2] sm:$0xf]
      %233 = vxpose.xlu0.b32.start [1/16] %v231, 128
      %234 = vxpose.xlu0.b32.cont [2/16] 0.0, 128
      %235 = vxpose.xlu0.b32.cont [3/16] 0.0, 128
      %236 = vxpose.xlu0.b32.cont [4/16] 0.0, 128
      %237 = vxpose.xlu0.b32.cont [5/16] 0.0, 128
      %238 = vxpose.xlu0.b32.cont [6/16] 0.0, 128
      %239 = vxpose.xlu0.b32.cont [7/16] 0.0, 128
      %240 = vxpose.xlu0.b32.cont [8/16] 0.0, 128
      %241 = vxpose.xlu0.b32.cont [9/16] 0.0, 128
      %242 = vxpose.xlu0.b32.cont [10/16] 0.0, 128
      %243 = vxpose.xlu0.b32.cont [11/16] 0.0, 128
      %244 = vxpose.xlu0.b32.cont [12/16] 0.0, 128
      %245 = vxpose.xlu0.b32.cont [13/16] 0.0, 128
      %246 = vxpose.xlu0.b32.cont [14/16] 0.0, 128
      %247 = vxpose.xlu0.b32.cont [15/16] 0.0, 128
      %248 = vxpose.xlu0.b32.end [16/16] 0.0, 128
      %v249 = vpop.trf.xlu0
      %v250 = vpop.trf.xlu0
      %v251 = vpop.trf.xlu0
      %v252 = vpop.trf.xlu0
      %v253 = vpop.trf.xlu0
      %v254 = vpop.trf.xlu0
      %v255 = vpop.trf.xlu0
      %v256 = vpop.trf.xlu0
      %v257 = vpop.trf.xlu0
      %v258 = vpop.trf.xlu0
      %v259 = vpop.trf.xlu0
      %v260 = vpop.trf.xlu0
      %v261 = vpop.trf.xlu0
      %v262 = vpop.trf.xlu0
      %v263 = vpop.trf.xlu0
      %v264 = vpop.trf.xlu0
      %vm265 = vcmask 31744
      %v267 = vsel %vm265, %v249, 0
      %v270 = vsel %vm265, %v250, 0
      %v273 = vsel %vm265, %v251, 0
      %v276 = vsel %vm265, %v252, 0
      %v279 = vsel %vm265, %v253, 0
      %v282 = vsel %vm265, %v254, 0
      %v285 = vsel %vm265, %v255, 0
      %v288 = vsel %vm265, %v256, 0
      %v291 = vsel %vm265, %v257, 0
      %v294 = vsel %vm265, %v258, 0
      %v297 = vsel %vm265, %v259, 0
      %v300 = vsel %vm265, %v260, 0
      %v303 = vsel %vm265, %v261, 0
      %v306 = vsel %vm265, %v262, 0
      %v309 = vsel %vm265, %v263, 0
      %v312 = vsel %vm265, %v264, 0
      %vm314 = vcmask 1043456
      %v316 = vsel %vm314, %v232, 0
      %318 = vmatprep.subr.mxu0 0.0
      %319 = vmatpush1.msra.mxu0 %v316
      %320 = vmatprep.subr.mxu0 0.0
      %321 = vmatpush1.msra.mxu0 0.0
      %322 = vmatprep.subr.mxu0 0.0
      %323 = vmatpush1.msra.mxu0 0.0
      %324 = vmatprep.subr.mxu0 0.0
      %325 = vmatpush1.msra.mxu0 0.0
      %326 = vmatprep.subr.mxu0 0.0
      %327 = vmatpush1.msra.mxu0 0.0
      %328 = vmatprep.subr.mxu0 0.0
      %329 = vmatpush1.msra.mxu0 0.0
      %330 = vmatprep.subr.mxu0 0.0
      %331 = vmatpush1.msra.mxu0 0.0
      %332 = vmatprep.subr.mxu0 0.0
      %333 = vmatpush1.msra.mxu0 0.0
      %334 = vmatprep.subr.mxu0 0.0
      %335 = vmatpush1.msra.mxu0 0.0
      %336 = vmatprep.subr.mxu0 0.0
      %337 = vmatpush1.msra.mxu0 0.0
      %338 = vmatprep.subr.mxu0 0.0
      %339 = vmatpush1.msra.mxu0 0.0
      %340 = vmatprep.subr.mxu0 0.0
      %341 = vmatpush1.msra.mxu0 0.0
      %342 = vmatprep.subr.mxu0 0.0
      %343 = vmatpush1.msra.mxu0 0.0
      %344 = vmatprep.subr.mxu0 0.0
      %345 = vmatpush1.msra.mxu0 0.0
      %346 = vmatprep.subr.mxu0 0.0
      %347 = vmatpush1.msra.mxu0 0.0
      %348 = vmatprep.subr.mxu0 0.0
      %349 = vmatpush1.msra.mxu0 0.0
      %350 = vmatprep.subr.mxu0 0.0
      %351 = vmatpush1.msra.mxu0 0.0
      %352 = vmatprep.subr.mxu0 0.0
      %353 = vmatpush1.msra.mxu0 0.0
      %354 = vmatprep.subr.mxu0 0.0
      %355 = vmatpush1.msra.mxu0 0.0
      %356 = vmatprep.subr.mxu0 0.0
      %357 = vmatpush1.msra.mxu0 0.0
      %358 = vmatprep.subr.mxu0 0.0
      %359 = vmatpush1.msra.mxu0 0.0
      %360 = vmatprep.subr.mxu0 0.0
      %361 = vmatpush1.msra.mxu0 0.0
      %362 = vmatprep.subr.mxu0 0.0
      %363 = vmatpush1.msra.mxu0 0.0
      %364 = vmatprep.subr.mxu0 0.0
      %365 = vmatpush1.msra.mxu0 0.0
      %366 = vmatprep.subr.mxu0 0.0
      %367 = vmatpush1.msra.mxu0 0.0
      %368 = vmatprep.subr.mxu0 0.0
      %369 = vmatpush1.msra.mxu0 0.0
      %370 = vmatprep.subr.mxu0 0.0
      %371 = vmatpush1.msra.mxu0 0.0
      %372 = vmatprep.subr.mxu0 0.0
      %373 = vmatpush1.msra.mxu0 0.0
      %374 = vmatprep.subr.mxu0 0.0
      %375 = vmatpush1.msra.mxu0 0.0
      %376 = vmatprep.subr.mxu0 0.0
      %377 = vmatpush1.msra.mxu0 0.0
      %378 = vmatprep.subr.mxu0 0.0
      %379 = vmatpush1.msra.mxu0 0.0
      %380 = vmatprep.subr.mxu0 0.0
      %381 = vmatpush1.msra.mxu0 0.0
      %382 = vmatprep.mubr.f32.mxu0 0.0
      %383 = vmatmul.mubr.f32.gmra.mrb[0].mxu0 %v267
      %v384 = vpop.f32.mrb[0].mxu0
      %v385 = vadd.f32 0.0, %v384
      %v386 = vpop.f32.mrb[0].mxu0
      %387 = vmatprep.mubr.f32.mxu0 0.0
      %388 = vmatmul.mubr.f32.gmra.mrb[0].mxu0 %v270
      %v389 = vpop.f32.mrb[0].mxu0
      %v390 = vadd.f32 0.0, %v389
      %v391 = vpop.f32.mrb[0].mxu0
      %392 = vmatprep.mubr.f32.mxu0 0.0
      %393 = vmatmul.mubr.f32.gmra.mrb[0].mxu0 %v273
      %v394 = vpop.f32.mrb[0].mxu0
      %v395 = vadd.f32 0.0, %v394
      %v396 = vpop.f32.mrb[0].mxu0
      %397 = vmatprep.mubr.f32.mxu0 0.0
      %398 = vmatmul.mubr.f32.gmra.mrb[0].mxu0 %v276
      %v399 = vpop.f32.mrb[0].mxu0
      %v400 = vadd.f32 0.0, %v399
      %v401 = vpop.f32.mrb[0].mxu0
      %402 = vmatprep.mubr.f32.mxu0 0.0
      %403 = vmatmul.mubr.f32.gmra.mrb[0].mxu0 %v279
      %v404 = vpop.f32.mrb[0].mxu0
      %v405 = vadd.f32 0.0, %v404
      %v406 = vpop.f32.mrb[0].mxu0
      %407 = vmatprep.mubr.f32.mxu0 0.0
      %408 = vmatmul.mubr.f32.gmra.mrb[0].mxu0 %v282
      %v409 = vpop.f32.mrb[0].mxu0
      %v410 = vadd.f32 0.0, %v409
      %v411 = vpop.f32.mrb[0].mxu0
      %412 = vmatprep.mubr.f32.mxu0 0.0
      %413 = vmatmul.mubr.f32.gmra.mrb[0].mxu0 %v285
      %v414 = vpop.f32.mrb[0].mxu0
      %v415 = vadd.f32 0.0, %v414
      %v416 = vpop.f32.mrb[0].mxu0
      %417 = vmatprep.mubr.f32.mxu0 0.0
      %418 = vmatmul.mubr.f32.gmra.mrb[0].mxu0 %v288
      %v419 = vpop.f32.mrb[0].mxu0
      %v420 = vadd.f32 0.0, %v419
      %v421 = vpop.f32.mrb[0].mxu0
      %422 = vmatprep.mubr.f32.mxu0 0.0
      %423 = vmatmul.mubr.f32.gmra.mrb[0].mxu0 %v291
      %v424 = vpop.f32.mrb[0].mxu0
      %v425 = vadd.f32 0.0, %v424
      %v426 = vpop.f32.mrb[0].mxu0
      %427 = vmatprep.mubr.f32.mxu0 0.0
      %428 = vmatmul.mubr.f32.gmra.mrb[0].mxu0 %v294
      %v429 = vpop.f32.mrb[0].mxu0
      %v430 = vadd.f32 0.0, %v429
      %v431 = vpop.f32.mrb[0].mxu0
      %432 = vmatprep.mubr.f32.mxu0 0.0
      %433 = vmatmul.mubr.f32.gmra.mrb[0].mxu0 %v297
      %v434 = vpop.f32.mrb[0].mxu0
      %v435 = vadd.f32 0.0, %v434
      %v436 = vpop.f32.mrb[0].mxu0
      %437 = vmatprep.mubr.f32.mxu0 0.0
      %438 = vmatmul.mubr.f32.gmra.mrb[0].mxu0 %v300
      %v439 = vpop.f32.mrb[0].mxu0
      %v440 = vadd.f32 0.0, %v439
      %v441 = vpop.f32.mrb[0].mxu0
      %442 = vmatprep.mubr.f32.mxu0 0.0
      %443 = vmatmul.mubr.f32.gmra.mrb[0].mxu0 %v303
      %v444 = vpop.f32.mrb[0].mxu0
      %v445 = vadd.f32 0.0, %v444
      %v446 = vpop.f32.mrb[0].mxu0
      %447 = vmatprep.mubr.f32.mxu0 0.0
      %448 = vmatmul.mubr.f32.gmra.mrb[0].mxu0 %v306
      %v449 = vpop.f32.mrb[0].mxu0
      %v450 = vadd.f32 0.0, %v449
      %v451 = vpop.f32.mrb[0].mxu0
      %452 = vmatprep.mubr.f32.mxu0 0.0
      %453 = vmatmul.mubr.f32.gmra.mrb[0].mxu0 %v309
      %v454 = vpop.f32.mrb[0].mxu0
      %v455 = vadd.f32 0.0, %v454
      %v456 = vpop.f32.mrb[0].mxu0
      %457 = vmatprep.mubr.f32.mxu0 0.0
      %458 = vmatmul.mubr.f32.gmra.mrb[0].mxu0 %v312
      %v459 = vpop.f32.mrb[0].mxu0
      %v460 = vadd.f32 0.0, %v459
      %v461 = vpop.f32.mrb[0].mxu0
      %462 = vdwg.mxu0
      %vm463 = vcmask 48128
      %464 = vst.msk [vmem:[#allocation2] sm:$0xff] %vm463, %v385
      %465 = vst.msk [vmem:[#allocation2 + $0x8] sm:$0xff] %vm463, %v390
      %466 = vst.msk [vmem:[#allocation2 + $0x10] sm:$0xff] %vm463, %v395
      %467 = vst.msk [vmem:[#allocation2 + $0x18] sm:$0xff] %vm463, %v400
      %468 = vst.msk [vmem:[#allocation2 + $0x20] sm:$0xff] %vm463, %v405
      %469 = vst.msk [vmem:[#allocation2 + $0x28] sm:$0xff] %vm463, %v410
      %470 = vst.msk [vmem:[#allocation2 + $0x30] sm:$0xff] %vm463, %v415
      %471 = vst.msk [vmem:[#allocation2 + $0x38] sm:$0xff] %vm463, %v420
      %472 = vst.msk [vmem:[#allocation2 + $0x40] sm:$0xff] %vm463, %v425
      %473 = vst.msk [vmem:[#allocation2 + $0x48] sm:$0xff] %vm463, %v430
      %474 = vst.msk [vmem:[#allocation2 + $0x50] sm:$0xff] %vm463, %v435
      %475 = vst.msk [vmem:[#allocation2 + $0x58] sm:$0xff] %vm463, %v440
      %476 = vst.msk [vmem:[#allocation2 + $0x60] sm:$0xff] %vm463, %v445
      %477 = vst.msk [vmem:[#allocation2 + $0x68] sm:$0xff] %vm463, %v450
      %478 = vst.msk [vmem:[#allocation2 + $0x70] sm:$0xff] %vm463, %v455
      %479 = vst.msk [vmem:[#allocation2 + $0x78] sm:$0xff] %vm463, %v460
      %v480 = vld [vmem:[%s1] sm:$0xff]
      %v481 = vld [vmem:[%s1 + $0x8] sm:$0xff]
      %v482 = vld [vmem:[%s3] sm:$0x1]
      %v483 = vld [vmem:[#allocation2] sm:$0xff]
      %v484 = vld [vmem:[#allocation2 + $0x8] sm:$0xff]
      %v486 = vlaneseq
      %v487 = vshrl.u32 %v486, 7
      %v488 = vsub.s32 0, %v487
      %v489 = vrot.slane %v482, %v488
      %vm491 = vcmask 130048
      %v493 = vsel %vm491, %v480, 0
      %v496 = vsel %vm491, %v481, 0
      %498 = vmatprep.subr.mxu0 0.0
      %499 = vmatpush1.msra.mxu0 %v483
      %500 = vmatprep.subr.mxu0 0.0
      %501 = vmatpush1.msra.mxu0 %v484
      %502 = vmatprep.subr.mxu0 0.0
      %503 = vmatpush1.msra.mxu0 0.0
      %504 = vmatprep.subr.mxu0 0.0
      %505 = vmatpush1.msra.mxu0 0.0
      %506 = vmatprep.subr.mxu0 0.0
      %507 = vmatpush1.msra.mxu0 0.0
      %508 = vmatprep.subr.mxu0 0.0
      %509 = vmatpush1.msra.mxu0 0.0
      %510 = vmatprep.subr.mxu0 0.0
      %511 = vmatpush1.msra.mxu0 0.0
      %512 = vmatprep.subr.mxu0 0.0
      %513 = vmatpush1.msra.mxu0 0.0
      %514 = vmatprep.subr.mxu0 0.0
      %515 = vmatpush1.msra.mxu0 0.0
      %516 = vmatprep.subr.mxu0 0.0
      %517 = vmatpush1.msra.mxu0 0.0
      %518 = vmatprep.subr.mxu0 0.0
      %519 = vmatpush1.msra.mxu0 0.0
      %520 = vmatprep.subr.mxu0 0.0
      %521 = vmatpush1.msra.mxu0 0.0
      %522 = vmatprep.subr.mxu0 0.0
      %523 = vmatpush1.msra.mxu0 0.0
      %524 = vmatprep.subr.mxu0 0.0
      %525 = vmatpush1.msra.mxu0 0.0
      %526 = vmatprep.subr.mxu0 0.0
      %527 = vmatpush1.msra.mxu0 0.0
      %528 = vmatprep.subr.mxu0 0.0
      %529 = vmatpush1.msra.mxu0 0.0
      %530 = vmatprep.subr.mxu0 0.0
      %531 = vmatpush1.msra.mxu0 0.0
      %532 = vmatprep.subr.mxu0 0.0
      %533 = vmatpush1.msra.mxu0 0.0
      %534 = vmatprep.subr.mxu0 0.0
      %535 = vmatpush1.msra.mxu0 0.0
      %536 = vmatprep.subr.mxu0 0.0
      %537 = vmatpush1.msra.mxu0 0.0
      %538 = vmatprep.subr.mxu0 0.0
      %539 = vmatpush1.msra.mxu0 0.0
      %540 = vmatprep.subr.mxu0 0.0
      %541 = vmatpush1.msra.mxu0 0.0
      %542 = vmatprep.subr.mxu0 0.0
      %543 = vmatpush1.msra.mxu0 0.0
      %544 = vmatprep.subr.mxu0 0.0
      %545 = vmatpush1.msra.mxu0 0.0
      %546 = vmatprep.subr.mxu0 0.0
      %547 = vmatpush1.msra.mxu0 0.0
      %548 = vmatprep.subr.mxu0 0.0
      %549 = vmatpush1.msra.mxu0 0.0
      %550 = vmatprep.subr.mxu0 0.0
      %551 = vmatpush1.msra.mxu0 0.0
      %552 = vmatprep.subr.mxu0 0.0
      %553 = vmatpush1.msra.mxu0 0.0
      %554 = vmatprep.subr.mxu0 0.0
      %555 = vmatpush1.msra.mxu0 0.0
      %556 = vmatprep.subr.mxu0 0.0
      %557 = vmatpush1.msra.mxu0 0.0
      %558 = vmatprep.subr.mxu0 0.0
      %559 = vmatpush1.msra.mxu0 0.0
      %560 = vmatprep.subr.mxu0 0.0
      %561 = vmatpush1.msra.mxu0 0.0
      %562 = vmatprep.mubr.f32.mxu0 0.0
      %563 = vmatmul.mubr.f32.gmra.mrb[0].mxu0 %v493
      %v564 = vpop.f32.mrb[0].mxu0
      %v565 = vadd.f32 %v489, %v564
      %v566 = vpop.f32.mrb[0].mxu0
      %567 = vmatprep.mubr.f32.mxu0 0.0
      %568 = vmatmul.mubr.f32.gmra.mrb[0].mxu0 %v496
      %v569 = vpop.f32.mrb[0].mxu0
      %v570 = vadd.f32 %v489, %v569
      %v571 = vpop.f32.mrb[0].mxu0
      %572 = vdwg.mxu0
      %573 = vst.msk [vmem:[%s229] sm:$0xff] %vm463, %v565
      %574 = vst.msk [vmem:[%s229 + $0x8] sm:$0xff] %vm463, %v570
      %v575 = vld [vmem:[#allocation2 + $0x10] sm:$0xff]
      %v576 = vld [vmem:[#allocation2 + $0x18] sm:$0xff]
      %577 = vmatprep.subr.mxu0 0.0
      %578 = vmatpush1.msra.mxu0 %v575
      %579 = vmatprep.subr.mxu0 0.0
      %580 = vmatpush1.msra.mxu0 %v576
      %581 = vmatprep.subr.mxu0 0.0
      %582 = vmatpush1.msra.mxu0 0.0
      %583 = vmatprep.subr.mxu0 0.0
      %584 = vmatpush1.msra.mxu0 0.0
      %585 = vmatprep.subr.mxu0 0.0
      %586 = vmatpush1.msra.mxu0 0.0
      %587 = vmatprep.subr.mxu0 0.0
      %588 = vmatpush1.msra.mxu0 0.0
      %589 = vmatprep.subr.mxu0 0.0
      %590 = vmatpush1.msra.mxu0 0.0
      %591 = vmatprep.subr.mxu0 0.0
      %592 = vmatpush1.msra.mxu0 0.0
      %593 = vmatprep.subr.mxu0 0.0
      %594 = vmatpush1.msra.mxu0 0.0
      %595 = vmatprep.subr.mxu0 0.0
      %596 = vmatpush1.msra.mxu0 0.0
      %597 = vmatprep.subr.mxu0 0.0
      %598 = vmatpush1.msra.mxu0 0.0
      %599 = vmatprep.subr.mxu0 0.0
      %600 = vmatpush1.msra.mxu0 0.0
      %601 = vmatprep.subr.mxu0 0.0
      %602 = vmatpush1.msra.mxu0 0.0
      %603 = vmatprep.subr.mxu0 0.0
      %604 = vmatpush1.msra.mxu0 0.0
      %605 = vmatprep.subr.mxu0 0.0
      %606 = vmatpush1.msra.mxu0 0.0
      %607 = vmatprep.subr.mxu0 0.0
      %608 = vmatpush1.msra.mxu0 0.0
      %609 = vmatprep.subr.mxu0 0.0
      %610 = vmatpush1.msra.mxu0 0.0
      %611 = vmatprep.subr.mxu0 0.0
      %612 = vmatpush1.msra.mxu0 0.0
      %613 = vmatprep.subr.mxu0 0.0
      %614 = vmatpush1.msra.mxu0 0.0
      %615 = vmatprep.subr.mxu0 0.0
      %616 = vmatpush1.msra.mxu0 0.0
      %617 = vmatprep.subr.mxu0 0.0
      %618 = vmatpush1.msra.mxu0 0.0
      %619 = vmatprep.subr.mxu0 0.0
      %620 = vmatpush1.msra.mxu0 0.0
      %621 = vmatprep.subr.mxu0 0.0
      %622 = vmatpush1.msra.mxu0 0.0
      %623 = vmatprep.subr.mxu0 0.0
      %624 = vmatpush1.msra.mxu0 0.0
      %625 = vmatprep.subr.mxu0 0.0
      %626 = vmatpush1.msra.mxu0 0.0
      %627 = vmatprep.subr.mxu0 0.0
      %628 = vmatpush1.msra.mxu0 0.0
      %629 = vmatprep.subr.mxu0 0.0
      %630 = vmatpush1.msra.mxu0 0.0
      %631 = vmatprep.subr.mxu0 0.0
      %632 = vmatpush1.msra.mxu0 0.0
      %633 = vmatprep.subr.mxu0 0.0
      %634 = vmatpush1.msra.mxu0 0.0
      %635 = vmatprep.subr.mxu0 0.0
      %636 = vmatpush1.msra.mxu0 0.0
      %637 = vmatprep.subr.mxu0 0.0
      %638 = vmatpush1.msra.mxu0 0.0
      %639 = vmatprep.subr.mxu0 0.0
      %640 = vmatpush1.msra.mxu0 0.0
      %641 = vmatprep.mubr.f32.mxu0 0.0
      %642 = vmatmul.mubr.f32.gmra.mrb[0].mxu0 %v493
      %v643 = vpop.f32.mrb[0].mxu0
      %v644 = vadd.f32 %v489, %v643
      %v645 = vpop.f32.mrb[0].mxu0
      %646 = vmatprep.mubr.f32.mxu0 0.0
      %647 = vmatmul.mubr.f32.gmra.mrb[0].mxu0 %v496
      %v648 = vpop.f32.mrb[0].mxu0
      %v649 = vadd.f32 %v489, %v648
      %v650 = vpop.f32.mrb[0].mxu0
      %651 = vdwg.mxu0
      %s652 = scalar_lea.vmem %s229, 16
      %653 = vst.msk [vmem:[%s652] sm:$0xff] %vm463, %v644
      %654 = vst.msk [vmem:[%s652 + $0x8] sm:$0xff] %vm463, %v649
      %v655 = vld [vmem:[#allocation2 + $0x20] sm:$0xff]
      %v656 = vld [vmem:[#allocation2 + $0x28] sm:$0xff]
      %657 = vmatprep.subr.mxu0 0.0
      %658 = vmatpush1.msra.mxu0 %v655
      %659 = vmatprep.subr.mxu0 0.0
      %660 = vmatpush1.msra.mxu0 %v656
      %661 = vmatprep.subr.mxu0 0.0
      %662 = vmatpush1.msra.mxu0 0.0
      %663 = vmatprep.subr.mxu0 0.0
      %664 = vmatpush1.msra.mxu0 0.0
      %665 = vmatprep.subr.mxu0 0.0
      %666 = vmatpush1.msra.mxu0 0.0
      %667 = vmatprep.subr.mxu0 0.0
      %668 = vmatpush1.msra.mxu0 0.0
      %669 = vmatprep.subr.mxu0 0.0
      %670 = vmatpush1.msra.mxu0 0.0
      %671 = vmatprep.subr.mxu0 0.0
      %672 = vmatpush1.msra.mxu0 0.0
      %673 = vmatprep.subr.mxu0 0.0
      %674 = vmatpush1.msra.mxu0 0.0
      %675 = vmatprep.subr.mxu0 0.0
      %676 = vmatpush1.msra.mxu0 0.0
      %677 = vmatprep.subr.mxu0 0.0
      %678 = vmatpush1.msra.mxu0 0.0
      %679 = vmatprep.subr.mxu0 0.0
      %680 = vmatpush1.msra.mxu0 0.0
      %681 = vmatprep.subr.mxu0 0.0
      %682 = vmatpush1.msra.mxu0 0.0
      %683 = vmatprep.subr.mxu0 0.0
      %684 = vmatpush1.msra.mxu0 0.0
      %685 = vmatprep.subr.mxu0 0.0
      %686 = vmatpush1.msra.mxu0 0.0
      %687 = vmatprep.subr.mxu0 0.0
      %688 = vmatpush1.msra.mxu0 0.0
      %689 = vmatprep.subr.mxu0 0.0
      %690 = vmatpush1.msra.mxu0 0.0
      %691 = vmatprep.subr.mxu0 0.0
      %692 = vmatpush1.msra.mxu0 0.0
      %693 = vmatprep.subr.mxu0 0.0
      %694 = vmatpush1.msra.mxu0 0.0
      %695 = vmatprep.subr.mxu0 0.0
      %696 = vmatpush1.msra.mxu0 0.0
      %697 = vmatprep.subr.mxu0 0.0
      %698 = vmatpush1.msra.mxu0 0.0
      %699 = vmatprep.subr.mxu0 0.0
      %700 = vmatpush1.msra.mxu0 0.0
      %701 = vmatprep.subr.mxu0 0.0
      %702 = vmatpush1.msra.mxu0 0.0
      %703 = vmatprep.subr.mxu0 0.0
      %704 = vmatpush1.msra.mxu0 0.0
      %705 = vmatprep.subr.mxu0 0.0
      %706 = vmatpush1.msra.mxu0 0.0
      %707 = vmatprep.subr.mxu0 0.0
      %708 = vmatpush1.msra.mxu0 0.0
      %709 = vmatprep.subr.mxu0 0.0
      %710 = vmatpush1.msra.mxu0 0.0
      %711 = vmatprep.subr.mxu0 0.0
      %712 = vmatpush1.msra.mxu0 0.0
      %713 = vmatprep.subr.mxu0 0.0
      %714 = vmatpush1.msra.mxu0 0.0
      %715 = vmatprep.subr.mxu0 0.0
      %716 = vmatpush1.msra.mxu0 0.0
      %717 = vmatprep.subr.mxu0 0.0
      %718 = vmatpush1.msra.mxu0 0.0
      %719 = vmatprep.subr.mxu0 0.0
      %720 = vmatpush1.msra.mxu0 0.0
      %721 = vmatprep.mubr.f32.mxu0 0.0
      %722 = vmatmul.mubr.f32.gmra.mrb[0].mxu0 %v493
      %v723 = vpop.f32.mrb[0].mxu0
      %v724 = vadd.f32 %v489, %v723
      %v725 = vpop.f32.mrb[0].mxu0
      %726 = vmatprep.mubr.f32.mxu0 0.0
      %727 = vmatmul.mubr.f32.gmra.mrb[0].mxu0 %v496
      %v728 = vpop.f32.mrb[0].mxu0
      %v729 = vadd.f32 %v489, %v728
      %v730 = vpop.f32.mrb[0].mxu0
      %731 = vdwg.mxu0
      %s732 = scalar_lea.vmem %s229, 32
      %733 = vst.msk [vmem:[%s732] sm:$0xff] %vm463, %v724
      %734 = vst.msk [vmem:[%s732 + $0x8] sm:$0xff] %vm463, %v729
      %v735 = vld [vmem:[#allocation2 + $0x30] sm:$0xff]
      %v736 = vld [vmem:[#allocation2 + $0x38] sm:$0xff]
      %737 = vmatprep.subr.mxu0 0.0
      %738 = vmatpush1.msra.mxu0 %v735
      %739 = vmatprep.subr.mxu0 0.0
      %740 = vmatpush1.msra.mxu0 %v736
      %741 = vmatprep.subr.mxu0 0.0
      %742 = vmatpush1.msra.mxu0 0.0
      %743 = vmatprep.subr.mxu0 0.0
      %744 = vmatpush1.msra.mxu0 0.0
      %745 = vmatprep.subr.mxu0 0.0
      %746 = vmatpush1.msra.mxu0 0.0
      %747 = vmatprep.subr.mxu0 0.0
      %748 = vmatpush1.msra.mxu0 0.0
      %749 = vmatprep.subr.mxu0 0.0
      %750 = vmatpush1.msra.mxu0 0.0
      %751 = vmatprep.subr.mxu0 0.0
      %752 = vmatpush1.msra.mxu0 0.0
      %753 = vmatprep.subr.mxu0 0.0
      %754 = vmatpush1.msra.mxu0 0.0
      %755 = vmatprep.subr.mxu0 0.0
      %756 = vmatpush1.msra.mxu0 0.0
      %757 = vmatprep.subr.mxu0 0.0
      %758 = vmatpush1.msra.mxu0 0.0
      %759 = vmatprep.subr.mxu0 0.0
      %760 = vmatpush1.msra.mxu0 0.0
      %761 = vmatprep.subr.mxu0 0.0
      %762 = vmatpush1.msra.mxu0 0.0
      %763 = vmatprep.subr.mxu0 0.0
      %764 = vmatpush1.msra.mxu0 0.0
      %765 = vmatprep.subr.mxu0 0.0
      %766 = vmatpush1.msra.mxu0 0.0
      %767 = vmatprep.subr.mxu0 0.0
      %768 = vmatpush1.msra.mxu0 0.0
      %769 = vmatprep.subr.mxu0 0.0
      %770 = vmatpush1.msra.mxu0 0.0
      %771 = vmatprep.subr.mxu0 0.0
      %772 = vmatpush1.msra.mxu0 0.0
      %773 = vmatprep.subr.mxu0 0.0
      %774 = vmatpush1.msra.mxu0 0.0
      %775 = vmatprep.subr.mxu0 0.0
      %776 = vmatpush1.msra.mxu0 0.0
      %777 = vmatprep.subr.mxu0 0.0
      %778 = vmatpush1.msra.mxu0 0.0
      %779 = vmatprep.subr.mxu0 0.0
      %780 = vmatpush1.msra.mxu0 0.0
      %781 = vmatprep.subr.mxu0 0.0
      %782 = vmatpush1.msra.mxu0 0.0
      %783 = vmatprep.subr.mxu0 0.0
      %784 = vmatpush1.msra.mxu0 0.0
      %785 = vmatprep.subr.mxu0 0.0
      %786 = vmatpush1.msra.mxu0 0.0
      %787 = vmatprep.subr.mxu0 0.0
      %788 = vmatpush1.msra.mxu0 0.0
      %789 = vmatprep.subr.mxu0 0.0
      %790 = vmatpush1.msra.mxu0 0.0
      %791 = vmatprep.subr.mxu0 0.0
      %792 = vmatpush1.msra.mxu0 0.0
      %793 = vmatprep.subr.mxu0 0.0
      %794 = vmatpush1.msra.mxu0 0.0
      %795 = vmatprep.subr.mxu0 0.0
      %796 = vmatpush1.msra.mxu0 0.0
      %797 = vmatprep.subr.mxu0 0.0
      %798 = vmatpush1.msra.mxu0 0.0
      %799 = vmatprep.subr.mxu0 0.0
      %800 = vmatpush1.msra.mxu0 0.0
      %801 = vmatprep.mubr.f32.mxu0 0.0
      %802 = vmatmul.mubr.f32.gmra.mrb[0].mxu0 %v493
      %v803 = vpop.f32.mrb[0].mxu0
      %v804 = vadd.f32 %v489, %v803
      %v805 = vpop.f32.mrb[0].mxu0
      %806 = vmatprep.mubr.f32.mxu0 0.0
      %807 = vmatmul.mubr.f32.gmra.mrb[0].mxu0 %v496
      %v808 = vpop.f32.mrb[0].mxu0
      %v809 = vadd.f32 %v489, %v808
      %v810 = vpop.f32.mrb[0].mxu0
      %811 = vdwg.mxu0
      %s812 = scalar_lea.vmem %s229, 48
      %813 = vst.msk [vmem:[%s812] sm:$0xff] %vm463, %v804
      %814 = vst.msk [vmem:[%s812 + $0x8] sm:$0xff] %vm463, %v809
      %v815 = vld [vmem:[#allocation2 + $0x40] sm:$0xff]
      %v816 = vld [vmem:[#allocation2 + $0x48] sm:$0xff]
      %817 = vmatprep.subr.mxu0 0.0
      %818 = vmatpush1.msra.mxu0 %v815
      %819 = vmatprep.subr.mxu0 0.0
      %820 = vmatpush1.msra.mxu0 %v816
      %821 = vmatprep.subr.mxu0 0.0
      %822 = vmatpush1.msra.mxu0 0.0
      %823 = vmatprep.subr.mxu0 0.0
      %824 = vmatpush1.msra.mxu0 0.0
      %825 = vmatprep.subr.mxu0 0.0
      %826 = vmatpush1.msra.mxu0 0.0
      %827 = vmatprep.subr.mxu0 0.0
      %828 = vmatpush1.msra.mxu0 0.0
      %829 = vmatprep.subr.mxu0 0.0
      %830 = vmatpush1.msra.mxu0 0.0
      %831 = vmatprep.subr.mxu0 0.0
      %832 = vmatpush1.msra.mxu0 0.0
      %833 = vmatprep.subr.mxu0 0.0
      %834 = vmatpush1.msra.mxu0 0.0
      %835 = vmatprep.subr.mxu0 0.0
      %836 = vmatpush1.msra.mxu0 0.0
      %837 = vmatprep.subr.mxu0 0.0
      %838 = vmatpush1.msra.mxu0 0.0
      %839 = vmatprep.subr.mxu0 0.0
      %840 = vmatpush1.msra.mxu0 0.0
      %841 = vmatprep.subr.mxu0 0.0
      %842 = vmatpush1.msra.mxu0 0.0
      %843 = vmatprep.subr.mxu0 0.0
      %844 = vmatpush1.msra.mxu0 0.0
      %845 = vmatprep.subr.mxu0 0.0
      %846 = vmatpush1.msra.mxu0 0.0
      %847 = vmatprep.subr.mxu0 0.0
      %848 = vmatpush1.msra.mxu0 0.0
      %849 = vmatprep.subr.mxu0 0.0
      %850 = vmatpush1.msra.mxu0 0.0
      %851 = vmatprep.subr.mxu0 0.0
      %852 = vmatpush1.msra.mxu0 0.0
      %853 = vmatprep.subr.mxu0 0.0
      %854 = vmatpush1.msra.mxu0 0.0
      %855 = vmatprep.subr.mxu0 0.0
      %856 = vmatpush1.msra.mxu0 0.0
      %857 = vmatprep.subr.mxu0 0.0
      %858 = vmatpush1.msra.mxu0 0.0
      %859 = vmatprep.subr.mxu0 0.0
      %860 = vmatpush1.msra.mxu0 0.0
      %861 = vmatprep.subr.mxu0 0.0
      %862 = vmatpush1.msra.mxu0 0.0
      %863 = vmatprep.subr.mxu0 0.0
      %864 = vmatpush1.msra.mxu0 0.0
      %865 = vmatprep.subr.mxu0 0.0
      %866 = vmatpush1.msra.mxu0 0.0
      %867 = vmatprep.subr.mxu0 0.0
      %868 = vmatpush1.msra.mxu0 0.0
      %869 = vmatprep.subr.mxu0 0.0
      %870 = vmatpush1.msra.mxu0 0.0
      %871 = vmatprep.subr.mxu0 0.0
      %872 = vmatpush1.msra.mxu0 0.0
      %873 = vmatprep.subr.mxu0 0.0
      %874 = vmatpush1.msra.mxu0 0.0
      %875 = vmatprep.subr.mxu0 0.0
      %876 = vmatpush1.msra.mxu0 0.0
      %877 = vmatprep.subr.mxu0 0.0
      %878 = vmatpush1.msra.mxu0 0.0
      %879 = vmatprep.subr.mxu0 0.0
      %880 = vmatpush1.msra.mxu0 0.0
      %881 = vmatprep.mubr.f32.mxu0 0.0
      %882 = vmatmul.mubr.f32.gmra.mrb[0].mxu0 %v493
      %v883 = vpop.f32.mrb[0].mxu0
      %v884 = vadd.f32 %v489, %v883
      %v885 = vpop.f32.mrb[0].mxu0
      %886 = vmatprep.mubr.f32.mxu0 0.0
      %887 = vmatmul.mubr.f32.gmra.mrb[0].mxu0 %v496
      %v888 = vpop.f32.mrb[0].mxu0
      %v889 = vadd.f32 %v489, %v888
      %v890 = vpop.f32.mrb[0].mxu0
      %891 = vdwg.mxu0
      %s892 = scalar_lea.vmem %s229, 64
      %893 = vst.msk [vmem:[%s892] sm:$0xff] %vm463, %v884
      %894 = vst.msk [vmem:[%s892 + $0x8] sm:$0xff] %vm463, %v889
      %v895 = vld [vmem:[#allocation2 + $0x50] sm:$0xff]
      %v896 = vld [vmem:[#allocation2 + $0x58] sm:$0xff]
      %897 = vmatprep.subr.mxu0 0.0
      %898 = vmatpush1.msra.mxu0 %v895
      %899 = vmatprep.subr.mxu0 0.0
      %900 = vmatpush1.msra.mxu0 %v896
      %901 = vmatprep.subr.mxu0 0.0
      %902 = vmatpush1.msra.mxu0 0.0
      %903 = vmatprep.subr.mxu0 0.0
      %904 = vmatpush1.msra.mxu0 0.0
      %905 = vmatprep.subr.mxu0 0.0
      %906 = vmatpush1.msra.mxu0 0.0
      %907 = vmatprep.subr.mxu0 0.0
      %908 = vmatpush1.msra.mxu0 0.0
      %909 = vmatprep.subr.mxu0 0.0
      %910 = vmatpush1.msra.mxu0 0.0
      %911 = vmatprep.subr.mxu0 0.0
      %912 = vmatpush1.msra.mxu0 0.0
      %913 = vmatprep.subr.mxu0 0.0
      %914 = vmatpush1.msra.mxu0 0.0
      %915 = vmatprep.subr.mxu0 0.0
      %916 = vmatpush1.msra.mxu0 0.0
      %917 = vmatprep.subr.mxu0 0.0
      %918 = vmatpush1.msra.mxu0 0.0
      %919 = vmatprep.subr.mxu0 0.0
      %920 = vmatpush1.msra.mxu0 0.0
      %921 = vmatprep.subr.mxu0 0.0
      %922 = vmatpush1.msra.mxu0 0.0
      %923 = vmatprep.subr.mxu0 0.0
      %924 = vmatpush1.msra.mxu0 0.0
      %925 = vmatprep.subr.mxu0 0.0
      %926 = vmatpush1.msra.mxu0 0.0
      %927 = vmatprep.subr.mxu0 0.0
      %928 = vmatpush1.msra.mxu0 0.0
      %929 = vmatprep.subr.mxu0 0.0
      %930 = vmatpush1.msra.mxu0 0.0
      %931 = vmatprep.subr.mxu0 0.0
      %932 = vmatpush1.msra.mxu0 0.0
      %933 = vmatprep.subr.mxu0 0.0
      %934 = vmatpush1.msra.mxu0 0.0
      %935 = vmatprep.subr.mxu0 0.0
      %936 = vmatpush1.msra.mxu0 0.0
      %937 = vmatprep.subr.mxu0 0.0
      %938 = vmatpush1.msra.mxu0 0.0
      %939 = vmatprep.subr.mxu0 0.0
      %940 = vmatpush1.msra.mxu0 0.0
      %941 = vmatprep.subr.mxu0 0.0
      %942 = vmatpush1.msra.mxu0 0.0
      %943 = vmatprep.subr.mxu0 0.0
      %944 = vmatpush1.msra.mxu0 0.0
      %945 = vmatprep.subr.mxu0 0.0
      %946 = vmatpush1.msra.mxu0 0.0
      %947 = vmatprep.subr.mxu0 0.0
      %948 = vmatpush1.msra.mxu0 0.0
      %949 = vmatprep.subr.mxu0 0.0
      %950 = vmatpush1.msra.mxu0 0.0
      %951 = vmatprep.subr.mxu0 0.0
      %952 = vmatpush1.msra.mxu0 0.0
      %953 = vmatprep.subr.mxu0 0.0
      %954 = vmatpush1.msra.mxu0 0.0
      %955 = vmatprep.subr.mxu0 0.0
      %956 = vmatpush1.msra.mxu0 0.0
      %957 = vmatprep.subr.mxu0 0.0
      %958 = vmatpush1.msra.mxu0 0.0
      %959 = vmatprep.subr.mxu0 0.0
      %960 = vmatpush1.msra.mxu0 0.0
      %961 = vmatprep.mubr.f32.mxu0 0.0
      %962 = vmatmul.mubr.f32.gmra.mrb[0].mxu0 %v493
      %v963 = vpop.f32.mrb[0].mxu0
      %v964 = vadd.f32 %v489, %v963
      %v965 = vpop.f32.mrb[0].mxu0
      %966 = vmatprep.mubr.f32.mxu0 0.0
      %967 = vmatmul.mubr.f32.gmra.mrb[0].mxu0 %v496
      %v968 = vpop.f32.mrb[0].mxu0
      %v969 = vadd.f32 %v489, %v968
      %v970 = vpop.f32.mrb[0].mxu0
      %971 = vdwg.mxu0
      %s972 = scalar_lea.vmem %s229, 80
      %973 = vst.msk [vmem:[%s972] sm:$0xff] %vm463, %v964
      %974 = vst.msk [vmem:[%s972 + $0x8] sm:$0xff] %vm463, %v969
      %v975 = vld [vmem:[#allocation2 + $0x60] sm:$0xff]
      %v976 = vld [vmem:[#allocation2 + $0x68] sm:$0xff]
      %977 = vmatprep.subr.mxu0 0.0
      %978 = vmatpush1.msra.mxu0 %v975
      %979 = vmatprep.subr.mxu0 0.0
      %980 = vmatpush1.msra.mxu0 %v976
      %981 = vmatprep.subr.mxu0 0.0
      %982 = vmatpush1.msra.mxu0 0.0
      %983 = vmatprep.subr.mxu0 0.0
      %984 = vmatpush1.msra.mxu0 0.0
      %985 = vmatprep.subr.mxu0 0.0
      %986 = vmatpush1.msra.mxu0 0.0
      %987 = vmatprep.subr.mxu0 0.0
      %988 = vmatpush1.msra.mxu0 0.0
      %989 = vmatprep.subr.mxu0 0.0
      %990 = vmatpush1.msra.mxu0 0.0
      %991 = vmatprep.subr.mxu0 0.0
      %992 = vmatpush1.msra.mxu0 0.0
      %993 = vmatprep.subr.mxu0 0.0
      %994 = vmatpush1.msra.mxu0 0.0
      %995 = vmatprep.subr.mxu0 0.0
      %996 = vmatpush1.msra.mxu0 0.0
      %997 = vmatprep.subr.mxu0 0.0
      %998 = vmatpush1.msra.mxu0 0.0
      %999 = vmatprep.subr.mxu0 0.0
      %1000 = vmatpush1.msra.mxu0 0.0
      %1001 = vmatprep.subr.mxu0 0.0
      %1002 = vmatpush1.msra.mxu0 0.0
      %1003 = vmatprep.subr.mxu0 0.0
      %1004 = vmatpush1.msra.mxu0 0.0
      %1005 = vmatprep.subr.mxu0 0.0
      %1006 = vmatpush1.msra.mxu0 0.0
      %1007 = vmatprep.subr.mxu0 0.0
      %1008 = vmatpush1.msra.mxu0 0.0
      %1009 = vmatprep.subr.mxu0 0.0
      %1010 = vmatpush1.msra.mxu0 0.0
      %1011 = vmatprep.subr.mxu0 0.0
      %1012 = vmatpush1.msra.mxu0 0.0
      %1013 = vmatprep.subr.mxu0 0.0
      %1014 = vmatpush1.msra.mxu0 0.0
      %1015 = vmatprep.subr.mxu0 0.0
      %1016 = vmatpush1.msra.mxu0 0.0
      %1017 = vmatprep.subr.mxu0 0.0
      %1018 = vmatpush1.msra.mxu0 0.0
      %1019 = vmatprep.subr.mxu0 0.0
      %1020 = vmatpush1.msra.mxu0 0.0
      %1021 = vmatprep.subr.mxu0 0.0
      %1022 = vmatpush1.msra.mxu0 0.0
      %1023 = vmatprep.subr.mxu0 0.0
      %1024 = vmatpush1.msra.mxu0 0.0
      %1025 = vmatprep.subr.mxu0 0.0
      %1026 = vmatpush1.msra.mxu0 0.0
      %1027 = vmatprep.subr.mxu0 0.0
      %1028 = vmatpush1.msra.mxu0 0.0
      %1029 = vmatprep.subr.mxu0 0.0
      %1030 = vmatpush1.msra.mxu0 0.0
      %1031 = vmatprep.subr.mxu0 0.0
      %1032 = vmatpush1.msra.mxu0 0.0
      %1033 = vmatprep.subr.mxu0 0.0
      %1034 = vmatpush1.msra.mxu0 0.0
      %1035 = vmatprep.subr.mxu0 0.0
      %1036 = vmatpush1.msra.mxu0 0.0
      %1037 = vmatprep.subr.mxu0 0.0
      %1038 = vmatpush1.msra.mxu0 0.0
      %1039 = vmatprep.subr.mxu0 0.0
      %1040 = vmatpush1.msra.mxu0 0.0
      %1041 = vmatprep.mubr.f32.mxu0 0.0
      %1042 = vmatmul.mubr.f32.gmra.mrb[0].mxu0 %v493
      %v1043 = vpop.f32.mrb[0].mxu0
      %v1044 = vadd.f32 %v489, %v1043
      %v1045 = vpop.f32.mrb[0].mxu0
      %1046 = vmatprep.mubr.f32.mxu0 0.0
      %1047 = vmatmul.mubr.f32.gmra.mrb[0].mxu0 %v496
      %v1048 = vpop.f32.mrb[0].mxu0
      %v1049 = vadd.f32 %v489, %v1048
      %v1050 = vpop.f32.mrb[0].mxu0
      %1051 = vdwg.mxu0
      %s1052 = scalar_lea.vmem %s229, 96
      %1053 = vst.msk [vmem:[%s1052] sm:$0xff] %vm463, %v1044
      %1054 = vst.msk [vmem:[%s1052 + $0x8] sm:$0xff] %vm463, %v1049
      %v1055 = vld [vmem:[#allocation2 + $0x70] sm:$0xff]
      %v1056 = vld [vmem:[#allocation2 + $0x78] sm:$0xff]
      %1057 = vmatprep.subr.mxu0 0.0
      %1058 = vmatpush1.msra.mxu0 %v1055
      %1059 = vmatprep.subr.mxu0 0.0
      %1060 = vmatpush1.msra.mxu0 %v1056
      %1061 = vmatprep.subr.mxu0 0.0
      %1062 = vmatpush1.msra.mxu0 0.0
      %1063 = vmatprep.subr.mxu0 0.0
      %1064 = vmatpush1.msra.mxu0 0.0
      %1065 = vmatprep.subr.mxu0 0.0
      %1066 = vmatpush1.msra.mxu0 0.0
      %1067 = vmatprep.subr.mxu0 0.0
      %1068 = vmatpush1.msra.mxu0 0.0
      %1069 = vmatprep.subr.mxu0 0.0
      %1070 = vmatpush1.msra.mxu0 0.0
      %1071 = vmatprep.subr.mxu0 0.0
      %1072 = vmatpush1.msra.mxu0 0.0
      %1073 = vmatprep.subr.mxu0 0.0
      %1074 = vmatpush1.msra.mxu0 0.0
      %1075 = vmatprep.subr.mxu0 0.0
      %1076 = vmatpush1.msra.mxu0 0.0
      %1077 = vmatprep.subr.mxu0 0.0
      %1078 = vmatpush1.msra.mxu0 0.0
      %1079 = vmatprep.subr.mxu0 0.0
      %1080 = vmatpush1.msra.mxu0 0.0
      %1081 = vmatprep.subr.mxu0 0.0
      %1082 = vmatpush1.msra.mxu0 0.0
      %1083 = vmatprep.subr.mxu0 0.0
      %1084 = vmatpush1.msra.mxu0 0.0
      %1085 = vmatprep.subr.mxu0 0.0
      %1086 = vmatpush1.msra.mxu0 0.0
      %1087 = vmatprep.subr.mxu0 0.0
      %1088 = vmatpush1.msra.mxu0 0.0
      %1089 = vmatprep.subr.mxu0 0.0
      %1090 = vmatpush1.msra.mxu0 0.0
      %1091 = vmatprep.subr.mxu0 0.0
      %1092 = vmatpush1.msra.mxu0 0.0
      %1093 = vmatprep.subr.mxu0 0.0
      %1094 = vmatpush1.msra.mxu0 0.0
      %1095 = vmatprep.subr.mxu0 0.0
      %1096 = vmatpush1.msra.mxu0 0.0
      %1097 = vmatprep.subr.mxu0 0.0
      %1098 = vmatpush1.msra.mxu0 0.0
      %1099 = vmatprep.subr.mxu0 0.0
      %1100 = vmatpush1.msra.mxu0 0.0
      %1101 = vmatprep.subr.mxu0 0.0
      %1102 = vmatpush1.msra.mxu0 0.0
      %1103 = vmatprep.subr.mxu0 0.0
      %1104 = vmatpush1.msra.mxu0 0.0
      %1105 = vmatprep.subr.mxu0 0.0
      %1106 = vmatpush1.msra.mxu0 0.0
      %1107 = vmatprep.subr.mxu0 0.0
      %1108 = vmatpush1.msra.mxu0 0.0
      %1109 = vmatprep.subr.mxu0 0.0
      %1110 = vmatpush1.msra.mxu0 0.0
      %1111 = vmatprep.subr.mxu0 0.0
      %1112 = vmatpush1.msra.mxu0 0.0
      %1113 = vmatprep.subr.mxu0 0.0
      %1114 = vmatpush1.msra.mxu0 0.0
      %1115 = vmatprep.subr.mxu0 0.0
      %1116 = vmatpush1.msra.mxu0 0.0
      %1117 = vmatprep.subr.mxu0 0.0
      %1118 = vmatpush1.msra.mxu0 0.0
      %1119 = vmatprep.subr.mxu0 0.0
      %1120 = vmatpush1.msra.mxu0 0.0
      %1121 = vmatprep.mubr.f32.mxu0 0.0
      %1122 = vmatmul.mubr.f32.gmra.mrb[0].mxu0 %v493
      %v1123 = vpop.f32.mrb[0].mxu0
      %v1124 = vadd.f32 %v489, %v1123
      %v1125 = vpop.f32.mrb[0].mxu0
      %1126 = vmatprep.mubr.f32.mxu0 0.0
      %1127 = vmatmul.mubr.f32.gmra.mrb[0].mxu0 %v496
      %v1128 = vpop.f32.mrb[0].mxu0
      %v1129 = vadd.f32 %v489, %v1128
      %v1130 = vpop.f32.mrb[0].mxu0
      %1131 = vdwg.mxu0
      %s1132 = scalar_lea.vmem %s229, 112
      %1133 = vst.msk [vmem:[%s1132] sm:$0xff] %vm463, %v1124
      %1134 = vst.msk [vmem:[%s1132 + $0x8] sm:$0xff] %vm463, %v1129
      %s1135 = smul.u32 8, %s20
      %p1136 = scmp.lt.s32.totalorder %s19, 1
      %s1137 = scalar_select %p1136, %s19, 1
      %p1138 = scmp.lt.s32.totalorder %s1135, 7
      %s1139 = scalar_select %p1138, %s1135, 7
      %s1140 = smul.addr %s1139, 2
      %s1141 = smul.addr %s1137, 16
      %s1142 = sadd.s32 %s1140, %s1141
      %s1143 = smul.addr %s1142, 8
      %s1144 = scalar_lea.vmem %s4, %s1143
      // Predicated region
      $region37: #{graph_conv.1} parent=35 // pred_check
        %p1145 = pneg %p138
      $region38: #{graph_conv.1} parent=35 // pred_check_branch
        %1147 = sbr.rel (%p1145) target = $region40
      $region39: #{graph_conv.1} parent=35 // pred_region
        %s1148 = smul.u32 8, %s20
      $region40: #{graph_conv.1} parent=35 // pred_fallthru
        _
    $region36: #{graph_conv.1} parent=5 // pred_fallthru
      _
    %p1149 = scmp.le.s32.totalorder 2, %s10
    // Predicated region
    $region41: #{graph_conv.1} parent=5 // pred_check
      %p1150 = pneg %p1149
    $region42: #{graph_conv.1} parent=5 // pred_check_branch
      %1152 = sbr.rel (%p1150) target = $region44
    $region43: #{graph_conv.1} parent=5 // pred_region
      %s1153 = ssub.s32 %s10, 2
      // Predicated region
      $region45: #{graph_conv.1} parent=43 // pred_check
        %p1154 = pneg %p144
      $region46: #{graph_conv.1} parent=43 // pred_check_branch
        %1156 = sbr.rel (%p1154) target = $region48
      $region47: #{graph_conv.1} parent=43 // pred_region
        %s1157 = smul.u32 8, %s22
        %p1158 = scmp.lt.s32.totalorder %s21, 1
        %s1159 = scalar_select %p1158, %s21, 1
        %p1160 = scmp.lt.s32.totalorder %s1157, 7
        %s1161 = scalar_select %p1160, %s1157, 7
        %s1162 = smul.addr %s1161, 2
        %s1163 = smul.addr %s1159, 16
        %s1164 = sadd.s32 %s1162, %s1163
        %s1165 = smul.addr %s1164, 8
        %s1166 = scalar_lea.vmem %s4, %s1165
      $region48: #{graph_conv.1} parent=43 // pred_fallthru
        _
    $region44: #{graph_conv.1} parent=5 // pred_fallthru
      _
  $region6: #{graph_conv.1} parent=0 // loop_footer
    %s14 = sadd.s32 1, %s10
  $region7: #{graph_conv.1} parent=0 // loop_footer_branch
    %9 = sbr.rel target = $region3
  $region8: #{graph_conv.1} parent=0 // loop_exit
    _

</llo_original>
